<compile_context>
chip_gen: v7x
topology: tpu7x:2x2x1
jax: 0.10.0
libtpu: 0.0.40
codegen_flags: <defaults>
</compile_context>

<pallas_src>
import functools

import jax
import jax.numpy as jnp
from jax import lax
from jax.experimental import pallas as pl
from jax.experimental.pallas import tpu as pltpu


_TILE_ROWS = 8            # f32 sublane tile height: one vreg = (8, 128)
_LANES = 128              # lane width; feature dim is padded to a multiple of this
_MAX_ROWS_PER_STEP = 256  # rows gathered per grid step (amortizes per-step overhead)
_TINY_BATCH = 8           # below this, a plain XLA gather beats a kernel launch
_FB_ROWS = 8              # rows per step in the large-table fallback gather


def _round_up(x, m):
    return ((x + m - 1) // m) * m


def _vmem_capacity_bytes():
    """Per-core VMEM capacity (generation-aware); conservative fallback = 64 MiB (v7x)."""
    try:
        info = pltpu.get_tpu_info()
        for attr in ("vmem_capacity_bytes", "vmem_size_bytes", "vmem_bytes"):
            v = getattr(info, attr, None)
            if v:
                return int(v)
    except Exception:
        pass
    return 64 * 1024 * 1024


# ---------------------------------------------------------------------------
# forward gather, resident-table path:  out[i, :] = weight[idx[i], :]
#   - whole table lives (single-buffered) in a VMEM scratch, filled at step 0
#   - idx lives in SMEM via scalar prefetch
#   - 8 gathered rows assembled in vregs -> one unmasked (8, D) store per chunk
# ---------------------------------------------------------------------------
def _make_resident_gather_kernel(rows_per_step):
    n_chunks = rows_per_step // _TILE_ROWS

    def kernel(idx_ref, w_hbm, o_ref, w_vmem, sem):
        step = pl.program_id(0)

        # Bring the whole table into VMEM exactly once (no double buffer).
        @pl.when(step == 0)
        def _():
            cp = pltpu.make_async_copy(w_hbm, w_vmem, sem)
            cp.start()
            cp.wait()

        base = step * rows_per_step

        def chunk(c, carry):
            off = pl.multiple_of(c * _TILE_ROWS, _TILE_ROWS)
            # Assemble the 8 gathered rows in vregs, then do ONE unmasked
            # full-tile store (8 masked single-sublane stores would saturate
            # the single vector-store slot).
            rows = [
                w_vmem[pl.ds(idx_ref[base + off + r], 1), :]
                for r in range(_TILE_ROWS)
            ]
            o_ref[pl.ds(off, _TILE_ROWS), :] = jnp.concatenate(rows, axis=0)
            return carry

        lax.fori_loop(0, n_chunks, chunk, 0, unroll=(n_chunks <= 8))

    return kernel


@functools.lru_cache(maxsize=None)
def _build_resident_gather(n_rows, d_pad, b_pad, rows_per_step, dtype_name):
    dtype = jnp.dtype(dtype_name)
    table_bytes = n_rows * d_pad * dtype.itemsize
    out_tile_bytes = rows_per_step * d_pad * dtype.itemsize
    vmem_cap = _vmem_capacity_bytes()
    vmem_limit = int(
        min(vmem_cap, max(table_bytes + 4 * out_tile_bytes + (4 << 20), 16 << 20))
    )
    grid = b_pad // rows_per_step
    call = pl.pallas_call(
        _make_resident_gather_kernel(rows_per_step),
        out_shape=jax.ShapeDtypeStruct((b_pad, d_pad), dtype),
        grid_spec=pltpu.PrefetchScalarGridSpec(
            num_scalar_prefetch=1,
            grid=(grid,),
            in_specs=[pl.BlockSpec(memory_space=pl.ANY)],   # raw HBM table, 1 bulk DMA
            out_specs=pl.BlockSpec((rows_per_step, d_pad),
                                   lambda i, idx_ref: (i, 0)),
            scratch_shapes=[
                pltpu.VMEM((n_rows, d_pad), dtype),          # single-buffered table
                pltpu.SemaphoreType.DMA(()),
            ],
        ),
        compiler_params=pltpu.CompilerParams(
            # "arbitrary": the step-0 table DMA must precede every other step.
            # TODO(synk): a per-core table copy would allow "parallel" here and
            # feed both v7x TensorCores on very large batches.
            dimension_semantics=("arbitrary",),
            vmem_limit_bytes=vmem_limit,
        ),
    )
    return jax.jit(call)


# ---------------------------------------------------------------------------
# forward gather, large-table fallback: manual per-row DMA gather with the
# next chunk's 8 row-DMAs already in flight (double-buffered).
# ---------------------------------------------------------------------------
def _fallback_gather_kernel(idx_ref, w_hbm, o_ref, buf, sems):
    step = pl.program_id(0)
    nsteps = pl.num_programs(0)

    def start_chunk(s, slot):
        base = s * _FB_ROWS
        for r in range(_FB_ROWS):
            pltpu.make_async_copy(
                w_hbm.at[idx_ref[base + r]], buf.at[slot, r], sems.at[slot, r]
            ).start()

    @pl.when(step == 0)
    def _():
        start_chunk(0, 0)

    slot = step % 2

    @pl.when(step + 1 < nsteps)
    def _():
        start_chunk(step + 1, 1 - slot)

    for r in range(_FB_ROWS):
        pltpu.make_async_copy(w_hbm.at[0], buf.at[slot, r], sems.at[slot, r]).wait()
    o_ref[...] = buf[slot]            # one dense (8, D) store


@functools.lru_cache(maxsize=None)
def _build_fallback_gather(d_pad, b_pad, dtype_name):
    dtype = jnp.dtype(dtype_name)
    grid = b_pad // _FB_ROWS
    call = pl.pallas_call(
        _fallback_gather_kernel,
        out_shape=jax.ShapeDtypeStruct((b_pad, d_pad), dtype),
        grid_spec=pltpu.PrefetchScalarGridSpec(
            num_scalar_prefetch=1,
            grid=(grid,),
            in_specs=[pl.BlockSpec(memory_space=pl.ANY)],
            out_specs=pl.BlockSpec((_FB_ROWS, d_pad), lambda i, idx_ref: (i, 0)),
            scratch_shapes=[
                pltpu.VMEM((2, _FB_ROWS, d_pad), dtype),     # double-buffered rows
                pltpu.SemaphoreType.DMA((2, _FB_ROWS)),
            ],
        ),
        compiler_params=pltpu.CompilerParams(
            dimension_semantics=("arbitrary",),
        ),
    )
    return jax.jit(call)


def weights_forward(weight, idx, *, force_path=None):
    """Pallas equivalent of Weights.forward(loss, idx) -> weight[idx].

    `weight` is the lane-padded (N, D_pad) table. Returns rows of the padded
    table; callers slice off lane padding. Out-of-range indices are NOT
    bounds-checked (unlike the PyTorch reference).
    """
    idx_arr = jnp.asarray(idx, dtype=jnp.int32)
    scalar_input = idx_arr.ndim == 0
    idx_arr = jnp.atleast_1d(idx_arr)
    B = idx_arr.shape[0]
    N, D_pad = weight.shape
    dtype_name = jnp.dtype(weight.dtype).name

    # Tiny batches: kernel launch + padding costs more than the lookup itself.
    if force_path is None and B < _TINY_BATCH:
        out = jnp.take(weight, idx_arr, axis=0)
        return out[0] if scalar_input else out

    table_bytes = N * D_pad * jnp.dtype(weight.dtype).itemsize
    vmem_budget = (3 * _vmem_capacity_bytes()) // 4      # ~48 MiB v7x, ~96 MiB v5e/v6e
    if force_path is None:
        use_resident = table_bytes <= vmem_budget
    else:
        use_resident = force_path == "resident"

    if use_resident:
        B8 = _round_up(B, _TILE_ROWS)
        rows_per_step = min(_MAX_ROWS_PER_STEP, B8)
        # Keep >= 2 grid steps when the batch allows it (overlaps output
        # writeback with the gather; keeps the grid 2-TC friendly).
        if rows_per_step == B8 and B8 >= 2 * _TILE_ROWS:
            rows_per_step = _round_up(B8 // 2, _TILE_ROWS)
        B_pad = _round_up(B, rows_per_step)
        idx_pad = jnp.pad(idx_arr, (0, B_pad - B))
        call = _build_resident_gather(N, D_pad, B_pad, rows_per_step, dtype_name)
        out = call(idx_pad, weight)
    else:
        B_pad = _round_up(B, _FB_ROWS)
        idx_pad = jnp.pad(idx_arr, (0, B_pad - B))
        call = _build_fallback_gather(D_pad, B_pad, dtype_name)
        out = call(idx_pad, weight)

    if B_pad != B:
        out = out[:B]
    return out[0] if scalar_input else out


# ---------------------------------------------------------------------------
# fused set_weight:  weight[rows] = sigmoid(val)
# One grid step: sigmoid on all rows as a single VMEM block, then overlapping
# per-row DMAs scatter into the aliased HBM table. The old rows are never read
# and the untouched table is preserved via input->output aliasing (no copy).
# ---------------------------------------------------------------------------
def _set_weight_kernel(rows_ref, val_ref, w_in, w_out, sig_ref, sem):
    del w_in                                    # aliased old table: never read
    sig_ref[...] = jax.nn.sigmoid(val_ref[...])
    n_rows = sig_ref.shape[0]
    # TODO(synk): chunk this loop to bound in-flight DMAs for very large n_rows.
    for r in range(n_rows):
        pltpu.make_async_copy(sig_ref.at[r], w_out.at[rows_ref[r]], sem.at[r]).start()
    for r in range(n_rows):
        pltpu.make_async_copy(sig_ref.at[r], w_out.at[rows_ref[r]], sem.at[r]).wait()


@functools.partial(jax.jit, donate_argnums=(0,))
def _pallas_set_weight(weight, rows, vals):
    R = rows.shape[0]
    N, D_pad = weight.shape
    return pl.pallas_call(
        _set_weight_kernel,
        out_shape=jax.ShapeDtypeStruct((N, D_pad), weight.dtype),
        grid_spec=pltpu.PrefetchScalarGridSpec(
            num_scalar_prefetch=1,
            grid=(1,),
            in_specs=[
                pl.BlockSpec((R, D_pad), lambda i, rows_ref: (0, 0)),  # vals block
                pl.BlockSpec(memory_space=pl.ANY),                     # aliased table
            ],
            out_specs=pl.BlockSpec(memory_space=pl.ANY),               # written via DMA
            scratch_shapes=[
                pltpu.VMEM((R, D_pad), weight.dtype),
                pltpu.SemaphoreType.DMA((R,)),
            ],
        ),
        # args are (rows, vals, weight): alias the weight table to output 0.
        input_output_aliases={2: 0},
        compiler_params=pltpu.CompilerParams(
            dimension_semantics=("arbitrary",),
        ),
    )(rows, vals, weight)


# ---------------------------------------------------------------------------
# Thin Python-side container mirroring the nn.Module
# ---------------------------------------------------------------------------
class WeightsPallas:
    def __init__(self, shape):
        self.shape = tuple(shape)
        n, d = self.shape
        self._d = d
        self._d_pad = _round_up(d, _LANES)   # lane-dense (unmasked) stores need 128-aligned D
        # torch.ones(shape); lane padding (never exposed) is also 1.0.
        self.weight = jnp.ones((n, self._d_pad), dtype=jnp.float32)

    def set_weight(self, idx, val):
        rows = jnp.atleast_1d(jnp.asarray(idx, jnp.int32))
        vals = jnp.asarray(val, jnp.float32).reshape(rows.shape[0], self._d)
        if self._d_pad != self._d:
            vals = jnp.pad(vals, ((0, 0), (0, self._d_pad - self._d)))
        self.weight = _pallas_set_weight(self.weight, rows, vals)

    def __getitem__(self, idx):
        # TODO(synk): torch's Variable(requires_grad=True) wrapper has no Pallas
        # equivalent; autograd would be handled by surrounding JAX code.
        return self.forward(idx=idx)

    def forward(self, loss=None, idx=0, _force_path=None):
        out = weights_forward(self.weight, idx, force_path=_force_path)
        if self._d_pad != self._d:
            out = out[..., : self._d]
        return out

    __call__ = forward


if __name__ == "__main__":
    key = jax.random.PRNGKey(0)
    k1, k2 = jax.random.split(key)

    # Small, module-consistent shapes: 64-row x 128-feature weight table.
    N, D = 64, 128
    module = WeightsPallas((N, D))

    # set_weight (fused sigmoid + DMA scatter) on four rows.
    rows = jnp.array([1, 4, 7, 33], dtype=jnp.int32)
    vals = jax.random.normal(k1, (4, D), dtype=jnp.float32)
    module.set_weight(rows, vals)

    # Pure-JAX reference (checks both the fused update and the gathers below).
    ref_weight = jnp.ones((N, D), jnp.float32).at[rows].set(jax.nn.sigmoid(vals))

    # forward(idx): batched gather -> resident-table Pallas path (grid of 2 steps).
    idx = jax.random.randint(k2, (16,), 0, N, dtype=jnp.int32)
    out = jax.block_until_ready(module(loss=None, idx=idx))
    ref = ref_weight[idx]
    assert out.shape == (16, D), out.shape
    assert jnp.allclose(out, ref, atol=1e-5), "mismatch vs reference (resident path)"

    # Force the large-table fallback path (manual double-buffered row-DMA gather).
    out_fb = jax.block_until_ready(module.forward(idx=idx, _force_path="fallback"))
    assert out_fb.shape == (16, D), out_fb.shape
    assert jnp.allclose(out_fb, ref, atol=1e-5), "mismatch vs reference (fallback path)"

    # Scalar idx: tiny-batch XLA bypass, returns a single row like weight[0].
    out0 = jax.block_until_ready(module(idx=0))
    assert out0.shape == (D,), out0.shape
    assert jnp.allclose(out0, ref_weight[0], atol=1e-5), "mismatch on scalar idx"

    print("KERNEL_OK")
</pallas_src>

<mosaic_0001>
module attributes {stable_mosaic.version = 11 : i64} {
  func.func @_set_weight_kernel(%arg0: i32, %arg1: memref<4xi32, #tpu.memory_space<smem>>, %arg2: memref<4x128xf32, #tpu.memory_space<vmem>>, %arg3: memref<64x128xf32, #tpu.memory_space<any>>, %arg4: memref<64x128xf32, #tpu.memory_space<any>>, %arg5: memref<4x128xf32, #tpu.memory_space<vmem>>, %arg6: memref<4x!tpu.dma_semaphore, #tpu.memory_space<semaphore_mem>>) attributes {dimension_semantics = [#tpu.dimension_semantics<arbitrary>], iteration_bounds = array<i64: 1>, scalar_prefetch = 1 : i64, scratch_operands = 2 : i64, tpu.core_type = #tpu.core_type<tc>, window_params = [{pipeline_mode = #tpu.pipeline_mode<synchronous>, transform_indices = @transform_0, window_bounds = array<i64: 4, 128>}, {}, {}]} {
    %c0 = arith.constant 0 : index
    %c0_0 = arith.constant 0 : index
    %0 = vector.load %arg2[%c0, %c0_0] : memref<4x128xf32, #tpu.memory_space<vmem>>, vector<4x128xf32>
    %1 = arith.negf %0 : vector<4x128xf32>
    %2 = math.exp %1 : vector<4x128xf32>
    %cst = arith.constant 1.000000e+00 : f32
    %3 = vector.broadcast %cst : f32 to vector<4x128xf32>
    %4 = arith.addf %3, %2 : vector<4x128xf32>
    %5 = arith.divf %3, %4 : vector<4x128xf32>
    %c0_1 = arith.constant 0 : index
    %c0_2 = arith.constant 0 : index
    %6 = vector.load %arg5[%c0_1, %c0_2] : memref<4x128xf32, #tpu.memory_space<vmem>>, vector<4x128xf32>
    tpu.vector_store %arg5[%c0_1, %c0_2], %5 {strides = array<i32>} : memref<4x128xf32, #tpu.memory_space<vmem>>, vector<4x128xf32>,
    %c0_3 = arith.constant 0 : index
    %7 = memref.load %arg1[%c0_3] : memref<4xi32, #tpu.memory_space<smem>>
    %c0_i32 = arith.constant 0 : i32
    %c0_i32_4 = arith.constant 0 : i32
    %c0_i32_5 = arith.constant 0 : i32
    %8 = tpu.memref_slice %arg5[%c0_i32, %c0_i32_5] : memref<4x128xf32, #tpu.memory_space<vmem>> -> memref<1x128xf32, #tpu.memory_space<vmem>>
    %9 = tpu.memref_squeeze %8 : memref<1x128xf32, #tpu.memory_space<vmem>> -> memref<128xf32, #tpu.memory_space<vmem>>
    %c0_i32_6 = arith.constant 0 : i32
    %10 = tpu.memref_slice %arg4[%7, %c0_i32_6] : memref<64x128xf32, #tpu.memory_space<any>> -> memref<1x128xf32, #tpu.memory_space<any>>
    %11 = tpu.memref_squeeze %10 : memref<1x128xf32, #tpu.memory_space<any>> -> memref<128xf32, #tpu.memory_space<any>>
    %12 = tpu.memref_slice %arg6[%c0_i32_4] : memref<4x!tpu.dma_semaphore, #tpu.memory_space<semaphore_mem>> -> memref<1x!tpu.dma_semaphore, #tpu.memory_space<semaphore_mem>>
    %13 = tpu.memref_squeeze %12 : memref<1x!tpu.dma_semaphore, #tpu.memory_space<semaphore_mem>> -> memref<!tpu.dma_semaphore, #tpu.memory_space<semaphore_mem>>
    tpu.enqueue_dma source(%9 : memref<128xf32, #tpu.memory_space<vmem>>) target(%11 : memref<128xf32, #tpu.memory_space<any>>) target_semaphore(%13 : memref<!tpu.dma_semaphore, #tpu.memory_space<semaphore_mem>>)
    %c1 = arith.constant 1 : index
    %14 = memref.load %arg1[%c1] : memref<4xi32, #tpu.memory_space<smem>>
    %c1_i32 = arith.constant 1 : i32
    %c1_i32_7 = arith.constant 1 : i32
    %c0_i32_8 = arith.constant 0 : i32
    %15 = tpu.memref_slice %arg5[%c1_i32, %c0_i32_8] : memref<4x128xf32, #tpu.memory_space<vmem>> -> memref<1x128xf32, #tpu.memory_space<vmem>>
    %16 = tpu.memref_squeeze %15 : memref<1x128xf32, #tpu.memory_space<vmem>> -> memref<128xf32, #tpu.memory_space<vmem>>
    %c0_i32_9 = arith.constant 0 : i32
    %17 = tpu.memref_slice %arg4[%14, %c0_i32_9] : memref<64x128xf32, #tpu.memory_space<any>> -> memref<1x128xf32, #tpu.memory_space<any>>
    %18 = tpu.memref_squeeze %17 : memref<1x128xf32, #tpu.memory_space<any>> -> memref<128xf32, #tpu.memory_space<any>>
    %19 = tpu.memref_slice %arg6[%c1_i32_7] : memref<4x!tpu.dma_semaphore, #tpu.memory_space<semaphore_mem>> -> memref<1x!tpu.dma_semaphore, #tpu.memory_space<semaphore_mem>>
    %20 = tpu.memref_squeeze %19 : memref<1x!tpu.dma_semaphore, #tpu.memory_space<semaphore_mem>> -> memref<!tpu.dma_semaphore, #tpu.memory_space<semaphore_mem>>
    tpu.enqueue_dma source(%16 : memref<128xf32, #tpu.memory_space<vmem>>) target(%18 : memref<128xf32, #tpu.memory_space<any>>) target_semaphore(%20 : memref<!tpu.dma_semaphore, #tpu.memory_space<semaphore_mem>>)
    %c2 = arith.constant 2 : index
    %21 = memref.load %arg1[%c2] : memref<4xi32, #tpu.memory_space<smem>>
    %c2_i32 = arith.constant 2 : i32
    %c2_i32_10 = arith.constant 2 : i32
    %c0_i32_11 = arith.constant 0 : i32
    %22 = tpu.memref_slice %arg5[%c2_i32, %c0_i32_11] : memref<4x128xf32, #tpu.memory_space<vmem>> -> memref<1x128xf32, #tpu.memory_space<vmem>>
    %23 = tpu.memref_squeeze %22 : memref<1x128xf32, #tpu.memory_space<vmem>> -> memref<128xf32, #tpu.memory_space<vmem>>
    %c0_i32_12 = arith.constant 0 : i32
    %24 = tpu.memref_slice %arg4[%21, %c0_i32_12] : memref<64x128xf32, #tpu.memory_space<any>> -> memref<1x128xf32, #tpu.memory_space<any>>
    %25 = tpu.memref_squeeze %24 : memref<1x128xf32, #tpu.memory_space<any>> -> memref<128xf32, #tpu.memory_space<any>>
    %26 = tpu.memref_slice %arg6[%c2_i32_10] : memref<4x!tpu.dma_semaphore, #tpu.memory_space<semaphore_mem>> -> memref<1x!tpu.dma_semaphore, #tpu.memory_space<semaphore_mem>>
    %27 = tpu.memref_squeeze %26 : memref<1x!tpu.dma_semaphore, #tpu.memory_space<semaphore_mem>> -> memref<!tpu.dma_semaphore, #tpu.memory_space<semaphore_mem>>
    tpu.enqueue_dma source(%23 : memref<128xf32, #tpu.memory_space<vmem>>) target(%25 : memref<128xf32, #tpu.memory_space<any>>) target_semaphore(%27 : memref<!tpu.dma_semaphore, #tpu.memory_space<semaphore_mem>>)
    %c3 = arith.constant 3 : index
    %28 = memref.load %arg1[%c3] : memref<4xi32, #tpu.memory_space<smem>>
    %c3_i32 = arith.constant 3 : i32
    %c3_i32_13 = arith.constant 3 : i32
    %c0_i32_14 = arith.constant 0 : i32
    %29 = tpu.memref_slice %arg5[%c3_i32, %c0_i32_14] : memref<4x128xf32, #tpu.memory_space<vmem>> -> memref<1x128xf32, #tpu.memory_space<vmem>>
    %30 = tpu.memref_squeeze %29 : memref<1x128xf32, #tpu.memory_space<vmem>> -> memref<128xf32, #tpu.memory_space<vmem>>
    %c0_i32_15 = arith.constant 0 : i32
    %31 = tpu.memref_slice %arg4[%28, %c0_i32_15] : memref<64x128xf32, #tpu.memory_space<any>> -> memref<1x128xf32, #tpu.memory_space<any>>
    %32 = tpu.memref_squeeze %31 : memref<1x128xf32, #tpu.memory_space<any>> -> memref<128xf32, #tpu.memory_space<any>>
    %33 = tpu.memref_slice %arg6[%c3_i32_13] : memref<4x!tpu.dma_semaphore, #tpu.memory_space<semaphore_mem>> -> memref<1x!tpu.dma_semaphore, #tpu.memory_space<semaphore_mem>>
    %34 = tpu.memref_squeeze %33 : memref<1x!tpu.dma_semaphore, #tpu.memory_space<semaphore_mem>> -> memref<!tpu.dma_semaphore, #tpu.memory_space<semaphore_mem>>
    tpu.enqueue_dma source(%30 : memref<128xf32, #tpu.memory_space<vmem>>) target(%32 : memref<128xf32, #tpu.memory_space<any>>) target_semaphore(%34 : memref<!tpu.dma_semaphore, #tpu.memory_space<semaphore_mem>>)
    %c0_16 = arith.constant 0 : index
    %35 = memref.load %arg1[%c0_16] : memref<4xi32, #tpu.memory_space<smem>>
    %c0_i32_17 = arith.constant 0 : i32
    %c0_i32_18 = arith.constant 0 : i32
    %c0_i32_19 = arith.constant 0 : i32
    %36 = tpu.memref_slice %arg5[%c0_i32_17, %c0_i32_19] : memref<4x128xf32, #tpu.memory_space<vmem>> -> memref<1x128xf32, #tpu.memory_space<vmem>>
    %37 = tpu.memref_squeeze %36 : memref<1x128xf32, #tpu.memory_space<vmem>> -> memref<128xf32, #tpu.memory_space<vmem>>
    %c0_i32_20 = arith.constant 0 : i32
    %38 = tpu.memref_slice %arg4[%35, %c0_i32_20] : memref<64x128xf32, #tpu.memory_space<any>> -> memref<1x128xf32, #tpu.memory_space<any>>
    %39 = tpu.memref_squeeze %38 : memref<1x128xf32, #tpu.memory_space<any>> -> memref<128xf32, #tpu.memory_space<any>>
    %40 = tpu.memref_slice %arg6[%c0_i32_18] : memref<4x!tpu.dma_semaphore, #tpu.memory_space<semaphore_mem>> -> memref<1x!tpu.dma_semaphore, #tpu.memory_space<semaphore_mem>>
    %41 = tpu.memref_squeeze %40 : memref<1x!tpu.dma_semaphore, #tpu.memory_space<semaphore_mem>> -> memref<!tpu.dma_semaphore, #tpu.memory_space<semaphore_mem>>
    tpu.wait_dma2 semaphore(%41 : memref<!tpu.dma_semaphore, #tpu.memory_space<semaphore_mem>>) src(%37 : memref<128xf32, #tpu.memory_space<vmem>>) dst(%39 : memref<128xf32, #tpu.memory_space<any>>)
    %c1_21 = arith.constant 1 : index
    %42 = memref.load %arg1[%c1_21] : memref<4xi32, #tpu.memory_space<smem>>
    %c1_i32_22 = arith.constant 1 : i32
    %c1_i32_23 = arith.constant 1 : i32
    %c0_i32_24 = arith.constant 0 : i32
    %43 = tpu.memref_slice %arg5[%c1_i32_22, %c0_i32_24] : memref<4x128xf32, #tpu.memory_space<vmem>> -> memref<1x128xf32, #tpu.memory_space<vmem>>
    %44 = tpu.memref_squeeze %43 : memref<1x128xf32, #tpu.memory_space<vmem>> -> memref<128xf32, #tpu.memory_space<vmem>>
    %c0_i32_25 = arith.constant 0 : i32
    %45 = tpu.memref_slice %arg4[%42, %c0_i32_25] : memref<64x128xf32, #tpu.memory_space<any>> -> memref<1x128xf32, #tpu.memory_space<any>>
    %46 = tpu.memref_squeeze %45 : memref<1x128xf32, #tpu.memory_space<any>> -> memref<128xf32, #tpu.memory_space<any>>
    %47 = tpu.memref_slice %arg6[%c1_i32_23] : memref<4x!tpu.dma_semaphore, #tpu.memory_space<semaphore_mem>> -> memref<1x!tpu.dma_semaphore, #tpu.memory_space<semaphore_mem>>
    %48 = tpu.memref_squeeze %47 : memref<1x!tpu.dma_semaphore, #tpu.memory_space<semaphore_mem>> -> memref<!tpu.dma_semaphore, #tpu.memory_space<semaphore_mem>>
    tpu.wait_dma2 semaphore(%48 : memref<!tpu.dma_semaphore, #tpu.memory_space<semaphore_mem>>) src(%44 : memref<128xf32, #tpu.memory_space<vmem>>) dst(%46 : memref<128xf32, #tpu.memory_space<any>>)
    %c2_26 = arith.constant 2 : index
    %49 = memref.load %arg1[%c2_26] : memref<4xi32, #tpu.memory_space<smem>>
    %c2_i32_27 = arith.constant 2 : i32
    %c2_i32_28 = arith.constant 2 : i32
    %c0_i32_29 = arith.constant 0 : i32
    %50 = tpu.memref_slice %arg5[%c2_i32_27, %c0_i32_29] : memref<4x128xf32, #tpu.memory_space<vmem>> -> memref<1x128xf32, #tpu.memory_space<vmem>>
    %51 = tpu.memref_squeeze %50 : memref<1x128xf32, #tpu.memory_space<vmem>> -> memref<128xf32, #tpu.memory_space<vmem>>
    %c0_i32_30 = arith.constant 0 : i32
    %52 = tpu.memref_slice %arg4[%49, %c0_i32_30] : memref<64x128xf32, #tpu.memory_space<any>> -> memref<1x128xf32, #tpu.memory_space<any>>
    %53 = tpu.memref_squeeze %52 : memref<1x128xf32, #tpu.memory_space<any>> -> memref<128xf32, #tpu.memory_space<any>>
    %54 = tpu.memref_slice %arg6[%c2_i32_28] : memref<4x!tpu.dma_semaphore, #tpu.memory_space<semaphore_mem>> -> memref<1x!tpu.dma_semaphore, #tpu.memory_space<semaphore_mem>>
    %55 = tpu.memref_squeeze %54 : memref<1x!tpu.dma_semaphore, #tpu.memory_space<semaphore_mem>> -> memref<!tpu.dma_semaphore, #tpu.memory_space<semaphore_mem>>
    tpu.wait_dma2 semaphore(%55 : memref<!tpu.dma_semaphore, #tpu.memory_space<semaphore_mem>>) src(%51 : memref<128xf32, #tpu.memory_space<vmem>>) dst(%53 : memref<128xf32, #tpu.memory_space<any>>)
    %c3_31 = arith.constant 3 : index
    %56 = memref.load %arg1[%c3_31] : memref<4xi32, #tpu.memory_space<smem>>
    %c3_i32_32 = arith.constant 3 : i32
    %c3_i32_33 = arith.constant 3 : i32
    %c0_i32_34 = arith.constant 0 : i32
    %57 = tpu.memref_slice %arg5[%c3_i32_32, %c0_i32_34] : memref<4x128xf32, #tpu.memory_space<vmem>> -> memref<1x128xf32, #tpu.memory_space<vmem>>
    %58 = tpu.memref_squeeze %57 : memref<1x128xf32, #tpu.memory_space<vmem>> -> memref<128xf32, #tpu.memory_space<vmem>>
    %c0_i32_35 = arith.constant 0 : i32
    %59 = tpu.memref_slice %arg4[%56, %c0_i32_35] : memref<64x128xf32, #tpu.memory_space<any>> -> memref<1x128xf32, #tpu.memory_space<any>>
    %60 = tpu.memref_squeeze %59 : memref<1x128xf32, #tpu.memory_space<any>> -> memref<128xf32, #tpu.memory_space<any>>
    %61 = tpu.memref_slice %arg6[%c3_i32_33] : memref<4x!tpu.dma_semaphore, #tpu.memory_space<semaphore_mem>> -> memref<1x!tpu.dma_semaphore, #tpu.memory_space<semaphore_mem>>
    %62 = tpu.memref_squeeze %61 : memref<1x!tpu.dma_semaphore, #tpu.memory_space<semaphore_mem>> -> memref<!tpu.dma_semaphore, #tpu.memory_space<semaphore_mem>>
    tpu.wait_dma2 semaphore(%62 : memref<!tpu.dma_semaphore, #tpu.memory_space<semaphore_mem>>) src(%58 : memref<128xf32, #tpu.memory_space<vmem>>) dst(%60 : memref<128xf32, #tpu.memory_space<any>>)
    return
  }
  func.func @transform_0(%arg0: i32, %arg1: memref<4xi32, #tpu.memory_space<smem>>) -> (i32, i32) {
    %c0_i32 = arith.constant 0 : i32
    %c0_i32_0 = arith.constant 0 : i32
    %c0_i32_1 = arith.constant 0 : i32
    return %c0_i32, %c0_i32_0 : i32, i32
  }
}

</mosaic_0001>

<llo_original>
// kernel: _pallas_set_weight.1
$region0: #{_pallas_set_weight.1}
  #allocation0 [shape = 'u32[]', space=smem, size = 0x4, offset = 0x4, fixed_abs, tag = 'smem constant byte address 0x4 - core index']
  #allocation1 [shape = 'u32[144,128]{1,0:T(1,128)}', space=vmem, size = 0x12000, scoped, tag = 'internal scratch']
  #allocation2 [shape = 'f32[4,128]{1,0:T(4,128)}', space=vmem, size = 0x800, scoped, tag = 'scratch operand']
  #allocation3 [shape = 's32[4]{0}', space=sflag, size = 0x10, scoped, tag = 'scratch operand']
  #allocation4 [shape = 's32[1]{0}', space=sflag, size = 0x4, scoped, tag = 'scoped memory for _pallas_set_weight.1']
  #allocation5 [shape = 'u8[512]{0}', space=smem, size = 0x200, scoped, tag = 'prefetched SMEM operand 0']
  #allocation6 [shape = 's32[]', space=sflag, size = 0x4, offset = 0, fixed_abs, tag = 'sflag constant byte address 0x0 - dummy sync flag']
  #allocation7 [shape = 's32[]', space=sflag, size = 0x4, offset = 0, fixed_abs, tag = 'sflag constant byte address 0x0 - dummy sync flag']
  #allocation8 [shape = 'u32[]', space=smem, size = 0x4, offset = 0x44, fixed_abs, tag = 'smem constant byte address 0x44 - assertion arg 0']
  #allocation9 [shape = 'u32[]', space=smem, size = 0x4, offset = 0x48, fixed_abs, tag = 'smem constant byte address 0x48 - assertion arg 1']
  #allocation10 [shape = 's32[]', space=sflag, size = 0x4, offset = 0, fixed_abs, tag = 'sflag constant byte address 0x0 - dummy sync flag']
  #allocation11 [shape = 's32[]', space=sflag, size = 0x4, offset = 0, fixed_abs, tag = 'sflag constant byte address 0x0 - dummy sync flag']
  #allocation12 [shape = 's32[]', space=sflag, size = 0x4, offset = 0, fixed_abs, tag = 'sflag constant byte address 0x0 - dummy sync flag']
  #allocation13 [shape = 's32[]', space=sflag, size = 0x4, offset = 0, fixed_abs, tag = 'sflag constant byte address 0x0 - dummy sync flag']
  #allocation14 [shape = 's32[]', space=sflag, size = 0x4, offset = 0, fixed_abs, tag = 'sflag constant byte address 0x0 - dummy sync flag']
  #allocation15 [shape = 's32[]', space=sflag, size = 0x4, offset = 0, fixed_abs, tag = 'sflag constant byte address 0x0 - dummy sync flag']
  %s0 = inlined_call_operand.vmem [shape: s32[4], index: 0, kind: input, shape index: {}]
  %s1 = inlined_call_operand.vmem [shape: f32[4,128], index: 1, kind: input, shape index: {}]
  %s2 = inlined_call_operand.hbm [shape: f32[64,128], index: 2, kind: input, shape index: {}, may-alias: {2,3}]
  %s3 = inlined_call_operand.hbm [shape: f32[64,128], index: 3, kind: output, shape index: {}, may-alias: {2,3}]
  %s4 = sld [smem:[#allocation0]]
  $region22: #{_pallas_set_weight.1} parent=0
    _
  %s6 = ssub.s32 1, %s4
  %s7 = scalar_select 0, %s6, %s4
  %s8 = sshll.u32 %s0, 4
  %s9 = int_to_ptr.vmem [resolvable:$true] %s8
  %11 = dma.vmem_to_smem %s9, 16, [#allocation5], [#allocation4]
  %12 = dma.done [#allocation4], 16
  %13 = sfence
  // Predicated region
  $region2: #{_pallas_set_weight.1} parent=0 // pred_check
    _
  $region3: #{_pallas_set_weight.1} parent=0 // pred_check_branch
    %15 = sbr.rel (0) target = $region5
  $region4: #{_pallas_set_weight.1} parent=0 // pred_region
    _
  $region5: #{_pallas_set_weight.1} parent=0 // pred_fallthru
    _
  %v16 = vld [vmem:[%s1] sm:$0xf]
  %v17 = vxor.u32 %v16, 2147483648
  %v18 = vmul.f32 %v17, 1.442695
  %v19 = vpow.pop %v18
  %v20 = vadd.f32 %v19, 1.0
  %v21 = vrcp.pop %v20
  %v22 = vmul.f32 1.0, %v21
  %23 = vst [vmem:[#allocation2] sm:$0xf] %v22
  %s24 = sld [smem:[#allocation5]]
  %s25 = smul.addr %s24, 16
  %s26 = scalar_lea.hbm %s3, %s25
  // Predicated region
  $region6: #{_pallas_set_weight.1} parent=0 // pred_check
    _
  $region7: #{_pallas_set_weight.1} parent=0 // pred_check_branch
    %28 = sbr.rel target = $region9
  $region8: #{_pallas_set_weight.1} parent=0 // pred_region
    %29 = sst [smem:[#allocation8]] [#allocation7]
    %30 = sst [smem:[#allocation9]] [#allocation6]
  $region9: #{_pallas_set_weight.1} parent=0 // pred_fallthru
    _
  %32 = shalt.err (0)
  %s34 = sshll.u32 [#allocation2], 4
  %s35 = int_to_ptr.vmem [resolvable:$true] %s34
  %37 = dma.vmem_to_hbm [thread:$0]  %s35, 16, %s26, [#allocation3]
  %s38 = sld [smem:[#allocation5 + $0x1]]
  %s39 = scalar_lea.vmem [#allocation2], 1
  %s40 = smul.addr %s38, 16
  %s41 = scalar_lea.hbm %s3, %s40
  %s42 = scalar_lea.sflag [#allocation3], 1
  // Predicated region
  $region10: #{_pallas_set_weight.1} parent=0 // pred_check
    _
  $region11: #{_pallas_set_weight.1} parent=0 // pred_check_branch
    %44 = sbr.rel target = $region13
  $region12: #{_pallas_set_weight.1} parent=0 // pred_region
    %45 = sst [smem:[#allocation8]] [#allocation11]
    %46 = sst [smem:[#allocation9]] [#allocation10]
  $region13: #{_pallas_set_weight.1} parent=0 // pred_fallthru
    _
  %48 = shalt.err (0)
  %s50 = sshll.u32 %s39, 4
  %s51 = int_to_ptr.vmem [resolvable:$true] %s50
  %53 = dma.vmem_to_hbm [thread:$0]  %s51, 16, %s41, %s42
  %s54 = sld [smem:[#allocation5 + $0x2]]
  %s55 = scalar_lea.vmem [#allocation2], 2
  %s56 = smul.addr %s54, 16
  %s57 = scalar_lea.hbm %s3, %s56
  %s58 = scalar_lea.sflag [#allocation3], 2
  // Predicated region
  $region14: #{_pallas_set_weight.1} parent=0 // pred_check
    _
  $region15: #{_pallas_set_weight.1} parent=0 // pred_check_branch
    %60 = sbr.rel target = $region17
  $region16: #{_pallas_set_weight.1} parent=0 // pred_region
    %61 = sst [smem:[#allocation8]] [#allocation13]
    %62 = sst [smem:[#allocation9]] [#allocation12]
  $region17: #{_pallas_set_weight.1} parent=0 // pred_fallthru
    _
  %64 = shalt.err (0)
  %s66 = sshll.u32 %s55, 4
  %s67 = int_to_ptr.vmem [resolvable:$true] %s66
  %69 = dma.vmem_to_hbm [thread:$0]  %s67, 16, %s57, %s58
  %s70 = sld [smem:[#allocation5 + $0x3]]
  %s71 = scalar_lea.vmem [#allocation2], 3
  %s72 = smul.addr %s70, 16
  %s73 = scalar_lea.hbm %s3, %s72
  %s74 = scalar_lea.sflag [#allocation3], 3
  // Predicated region
  $region18: #{_pallas_set_weight.1} parent=0 // pred_check
    _
  $region19: #{_pallas_set_weight.1} parent=0 // pred_check_branch
    %76 = sbr.rel target = $region21
  $region20: #{_pallas_set_weight.1} parent=0 // pred_region
    %77 = sst [smem:[#allocation8]] [#allocation15]
    %78 = sst [smem:[#allocation9]] [#allocation14]
  $region21: #{_pallas_set_weight.1} parent=0 // pred_fallthru
    _
  %80 = shalt.err (0)
  %s82 = sshll.u32 %s71, 4
  %s83 = int_to_ptr.vmem [resolvable:$true] %s82
  %85 = dma.vmem_to_hbm [thread:$0]  %s83, 16, %s73, %s74
  %s86 = sld [smem:[#allocation5]]
  %88 = dma.done [#allocation3], 16
  %s89 = sld [smem:[#allocation5 + $0x1]]
  %91 = dma.done %s42, 16
  %s92 = sld [smem:[#allocation5 + $0x2]]
  %94 = dma.done %s58, 16
  %s95 = sld [smem:[#allocation5 + $0x3]]
  %97 = dma.done %s74, 16
  %98 = vsyncmov [#allocation3]
  %s99 = vpop.sfrf %98
  %p100 = scmp.eq.s32.totalorder %s99, 0
  %p101 = pneg %p100
  %103 = shalt.err (%p101)
  %s104 = scalar_lea.sflag [#allocation3], 1
  %105 = vsyncmov %s104
  %s106 = vpop.sfrf %105
  %p107 = scmp.eq.s32.totalorder %s106, 0
  %p108 = pneg %p107
  %110 = shalt.err (%p108)
  %s111 = scalar_lea.sflag [#allocation3], 2
  %112 = vsyncmov %s111
  %s113 = vpop.sfrf %112
  %p114 = scmp.eq.s32.totalorder %s113, 0
  %p115 = pneg %p114
  %117 = shalt.err (%p115)
  %s118 = scalar_lea.sflag [#allocation3], 3
  %119 = vsyncmov %s118
  %s120 = vpop.sfrf %119
  %p121 = scmp.eq.s32.totalorder %s120, 0
  %p122 = pneg %p121
  %124 = shalt.err (%p122)

</llo_original>
